<compile_context>
chip_gen: v6e
topology: v6e:2x2x1
jax: 0.10.0
libtpu: 0.0.40
codegen_flags: <defaults>
</compile_context>

<pallas_src>
import functools

import jax
import jax.numpy as jnp
from jax.experimental import pallas as pl
from jax.experimental.pallas import tpu as pltpu

HIDDEN = 64        # logical hidden width of the PyTorch module
HIDDEN_PAD = 128   # padded to a full lane group (vreg width)
LANE = 128


def _round_up(x, m):
    return ((x + m - 1) // m) * m


def mlp_kernel(obs_ref, w1_ref, b1_ref, w2_ref, b2_ref, w3_ref, b3_ref, out_ref):
    # Fused relu(x@W1+b1) -> relu(.@W2+b2) -> .@W3+b3 for one batch tile.
    # Matmuls feed the MXU in bf16 with f32 accumulation; bias-add/ReLU stay f32
    # on the VPU (v5e has no bf16 VPU).
    x = obs_ref[...].astype(jnp.bfloat16)
    h1 = jnp.dot(x, w1_ref[...], preferred_element_type=jnp.float32) + b1_ref[...]
    h1 = jnp.maximum(h1, 0.0)
    h2 = jnp.dot(h1.astype(jnp.bfloat16), w2_ref[...],
                 preferred_element_type=jnp.float32) + b2_ref[...]
    h2 = jnp.maximum(h2, 0.0)
    out = jnp.dot(h2.astype(jnp.bfloat16), w3_ref[...],
                  preferred_element_type=jnp.float32) + b3_ref[...]
    out_ref[...] = out.astype(out_ref.dtype)  # lane-dense (TILE_B, 128) store


@functools.partial(jax.jit, static_argnames=("tile_b",))
def high_level_policy_forward(obs, params, tile_b=512):
    w1, b1, w2, b2, w3, b3 = params  # logical (PyTorch-equivalent) shapes
    B, in_dim = obs.shape
    out_dim = w3.shape[1]
    out_pad = _round_up(out_dim, LANE)  # lane-dense output (vst, not vst.msk)

    # --- pad weights once: hidden 64 -> 128, out_dim -> 128 (zeros), cast to bf16.
    #     Zero padding keeps the forward pass bit-equivalent in the logical slice.
    w1p = jnp.zeros((in_dim, HIDDEN_PAD), jnp.bfloat16).at[:, :HIDDEN].set(
        w1.astype(jnp.bfloat16))
    b1p = jnp.zeros((1, HIDDEN_PAD), jnp.float32).at[:, :HIDDEN].set(b1)
    w2p = jnp.zeros((HIDDEN_PAD, HIDDEN_PAD), jnp.bfloat16).at[:HIDDEN, :HIDDEN].set(
        w2.astype(jnp.bfloat16))
    b2p = jnp.zeros((1, HIDDEN_PAD), jnp.float32).at[:, :HIDDEN].set(b2)
    w3p = jnp.zeros((HIDDEN_PAD, out_pad), jnp.bfloat16).at[:HIDDEN, :out_dim].set(
        w3.astype(jnp.bfloat16))
    b3p = jnp.zeros((1, out_pad), jnp.float32).at[:, :out_dim].set(b3)

    # --- batch tiling: multiple of 8 sublanes; pad batch so the grid divides it.
    # Per-step VMEM footprint at tile_b=512 is well under the 32 MiB scoped
    # default on every generation (incl. v7x), so no vmem_limit override needed.
    tb = max(8, min(_round_up(tile_b, 8), _round_up(B, 8)))
    b_pad = _round_up(B, tb)
    obs_p = obs if b_pad == B else jnp.zeros((b_pad, in_dim), obs.dtype).at[:B].set(obs)
    grid = (b_pad // tb,)

    resident = lambda shape: pl.BlockSpec(shape, lambda i: (0, 0))  # VMEM-resident

    flops = 2 * b_pad * (in_dim * HIDDEN_PAD + HIDDEN_PAD * HIDDEN_PAD
                         + HIDDEN_PAD * out_pad)
    bytes_accessed = (obs_p.size * 4 + b_pad * out_pad * 4
                      + (w1p.size + w2p.size + w3p.size) * 2
                      + (b1p.size + b2p.size + b3p.size) * 4)

    out_padded = pl.pallas_call(
        mlp_kernel,
        out_shape=jax.ShapeDtypeStruct((b_pad, out_pad), jnp.float32),
        grid=grid,
        in_specs=[
            pl.BlockSpec((tb, in_dim), lambda i: (i, 0)),
            resident(w1p.shape), resident(b1p.shape),
            resident(w2p.shape), resident(b2p.shape),
            resident(w3p.shape), resident(b3p.shape),
        ],
        out_specs=pl.BlockSpec((tb, out_pad), lambda i: (i, 0)),
        compiler_params=pltpu.CompilerParams(
            dimension_semantics=("parallel",)),  # shard batch over v7x's 2 TCs
        cost_estimate=pl.CostEstimate(
            flops=flops, transcendentals=0, bytes_accessed=bytes_accessed),
    )(obs_p, w1p, b1p, w2p, b2p, w3p, b3p)

    # Strip batch/lane padding outside the kernel with a cheap XLA slice.
    return out_padded[:B, :out_dim]


def init_params(key, in_dim, out_dim, hidden=HIDDEN):
    # Deterministic init mimicking PyTorch's default Linear init
    # (uniform(-1/sqrt(fan_in), 1/sqrt(fan_in))).
    keys = jax.random.split(key, 6)

    def linear(kw, kb, fan_in, fan_out):
        bound = 1.0 / jnp.sqrt(fan_in)
        # stored as (in_features, out_features) == W^T of the PyTorch layer
        w = jax.random.uniform(kw, (fan_in, fan_out), jnp.float32, -bound, bound)
        b = jax.random.uniform(kb, (1, fan_out), jnp.float32, -bound, bound)
        return w, b

    w1, b1 = linear(keys[0], keys[1], in_dim, hidden)
    w2, b2 = linear(keys[2], keys[3], hidden, hidden)
    w3, b3 = linear(keys[4], keys[5], hidden, out_dim)
    return (w1, b1, w2, b2, w3, b3)


def reference_forward(obs, params):
    w1, b1, w2, b2, w3, b3 = params
    h1 = jax.nn.relu(obs @ w1 + b1)
    h2 = jax.nn.relu(h1 @ w2 + b2)
    return h2 @ w3 + b3


if __name__ == "__main__":
    key = jax.random.PRNGKey(0)
    k_obs, k_param = jax.random.split(key)

    batch, in_dim, out_dim = 8, 32, 16
    obs = jax.random.normal(k_obs, (batch, in_dim), dtype=jnp.float32)
    params = init_params(k_param, in_dim, out_dim)

    out = high_level_policy_forward(obs, params)
    out = jax.block_until_ready(out)

    ref = reference_forward(obs, params)
    assert out.shape == (batch, out_dim)
    # bf16 MXU inputs (f32 accumulation) -> widened tolerance vs pure-f32 reference.
    assert jnp.allclose(out, ref, atol=5e-2, rtol=5e-2), (
        float(jnp.max(jnp.abs(out - ref))))

    print("KERNEL_OK")
</pallas_src>

<mosaic_0001>
module attributes {stable_mosaic.version = 11 : i64} {
  func.func @mlp_kernel(%arg0: i32, %arg1: memref<8x32xf32, #tpu.memory_space<vmem>>, %arg2: memref<32x128xbf16, #tpu.memory_space<vmem>>, %arg3: memref<1x128xf32, #tpu.memory_space<vmem>>, %arg4: memref<128x128xbf16, #tpu.memory_space<vmem>>, %arg5: memref<1x128xf32, #tpu.memory_space<vmem>>, %arg6: memref<128x128xbf16, #tpu.memory_space<vmem>>, %arg7: memref<1x128xf32, #tpu.memory_space<vmem>>, %arg8: memref<8x128xf32, #tpu.memory_space<vmem>>) attributes {dimension_semantics = [#tpu.dimension_semantics<parallel>], iteration_bounds = array<i64: 1>, scalar_prefetch = 0 : i64, scratch_operands = 0 : i64, tpu.core_type = #tpu.core_type<tc>, window_params = [{transform_indices = @transform_0, window_bounds = array<i64: 8, 32>}, {pipeline_mode = #tpu.pipeline_mode<synchronous>, transform_indices = @transform_1, window_bounds = array<i64: 32, 128>}, {pipeline_mode = #tpu.pipeline_mode<synchronous>, transform_indices = @transform_2, window_bounds = array<i64: 1, 128>}, {pipeline_mode = #tpu.pipeline_mode<synchronous>, transform_indices = @transform_3, window_bounds = array<i64: 128, 128>}, {pipeline_mode = #tpu.pipeline_mode<synchronous>, transform_indices = @transform_4, window_bounds = array<i64: 1, 128>}, {pipeline_mode = #tpu.pipeline_mode<synchronous>, transform_indices = @transform_5, window_bounds = array<i64: 128, 128>}, {pipeline_mode = #tpu.pipeline_mode<synchronous>, transform_indices = @transform_6, window_bounds = array<i64: 1, 128>}, {transform_indices = @transform_7, window_bounds = array<i64: 8, 128>}]} {
    %c0 = arith.constant 0 : index
    %c0_0 = arith.constant 0 : index
    %0 = vector.load %arg1[%c0, %c0_0] : memref<8x32xf32, #tpu.memory_space<vmem>>, vector<8x32xf32>
    %1 = arith.truncf %0 : vector<8x32xf32> to vector<8x32xbf16>
    %c0_1 = arith.constant 0 : index
    %c0_2 = arith.constant 0 : index
    %2 = vector.load %arg2[%c0_1, %c0_2] : memref<32x128xbf16, #tpu.memory_space<vmem>>, vector<32x128xbf16>
    %cst = arith.constant dense<0.000000e+00> : vector<8x128xf32>
    %3 = tpu.matmul %1, %2, %cst {dimension_numbers = #tpu.dot_dimension_numbers<[1], [0], [0], [1], [0, 0, 1, 1], [], []>} : vector<8x32xbf16>, vector<32x128xbf16>, vector<8x128xf32> -> vector<8x128xf32>
    %c0_3 = arith.constant 0 : index
    %c0_4 = arith.constant 0 : index
    %4 = vector.load %arg3[%c0_3, %c0_4] : memref<1x128xf32, #tpu.memory_space<vmem>>, vector<1x128xf32>
    %5 = vector.broadcast %4 : vector<1x128xf32> to vector<8x128xf32>
    %6 = arith.addf %3, %5 : vector<8x128xf32>
    %cst_5 = arith.constant 0.000000e+00 : f32
    %7 = vector.broadcast %cst_5 : f32 to vector<8x128xf32>
    %8 = arith.maximumf %6, %7 : vector<8x128xf32>
    %9 = arith.truncf %8 : vector<8x128xf32> to vector<8x128xbf16>
    %c0_6 = arith.constant 0 : index
    %c0_7 = arith.constant 0 : index
    %10 = vector.load %arg4[%c0_6, %c0_7] : memref<128x128xbf16, #tpu.memory_space<vmem>>, vector<128x128xbf16>
    %cst_8 = arith.constant dense<0.000000e+00> : vector<8x128xf32>
    %11 = tpu.matmul %9, %10, %cst_8 {dimension_numbers = #tpu.dot_dimension_numbers<[1], [0], [0], [1], [0, 0, 1, 1], [], []>} : vector<8x128xbf16>, vector<128x128xbf16>, vector<8x128xf32> -> vector<8x128xf32>
    %c0_9 = arith.constant 0 : index
    %c0_10 = arith.constant 0 : index
    %12 = vector.load %arg5[%c0_9, %c0_10] : memref<1x128xf32, #tpu.memory_space<vmem>>, vector<1x128xf32>
    %13 = vector.broadcast %12 : vector<1x128xf32> to vector<8x128xf32>
    %14 = arith.addf %11, %13 : vector<8x128xf32>
    %cst_11 = arith.constant 0.000000e+00 : f32
    %15 = vector.broadcast %cst_11 : f32 to vector<8x128xf32>
    %16 = arith.maximumf %14, %15 : vector<8x128xf32>
    %17 = arith.truncf %16 : vector<8x128xf32> to vector<8x128xbf16>
    %c0_12 = arith.constant 0 : index
    %c0_13 = arith.constant 0 : index
    %18 = vector.load %arg6[%c0_12, %c0_13] : memref<128x128xbf16, #tpu.memory_space<vmem>>, vector<128x128xbf16>
    %cst_14 = arith.constant dense<0.000000e+00> : vector<8x128xf32>
    %19 = tpu.matmul %17, %18, %cst_14 {dimension_numbers = #tpu.dot_dimension_numbers<[1], [0], [0], [1], [0, 0, 1, 1], [], []>} : vector<8x128xbf16>, vector<128x128xbf16>, vector<8x128xf32> -> vector<8x128xf32>
    %c0_15 = arith.constant 0 : index
    %c0_16 = arith.constant 0 : index
    %20 = vector.load %arg7[%c0_15, %c0_16] : memref<1x128xf32, #tpu.memory_space<vmem>>, vector<1x128xf32>
    %21 = vector.broadcast %20 : vector<1x128xf32> to vector<8x128xf32>
    %22 = arith.addf %19, %21 : vector<8x128xf32>
    %c0_17 = arith.constant 0 : index
    %c0_18 = arith.constant 0 : index
    %23 = vector.load %arg8[%c0_17, %c0_18] : memref<8x128xf32, #tpu.memory_space<vmem>>, vector<8x128xf32>
    tpu.vector_store %arg8[%c0_17, %c0_18], %22 {strides = array<i32>} : memref<8x128xf32, #tpu.memory_space<vmem>>, vector<8x128xf32>,
    return
  }
  func.func @transform_0(%arg0: i32) -> (i32, i32) {
    %c0_i32 = arith.constant 0 : i32
    %c0_i32_0 = arith.constant 0 : i32
    return %arg0, %c0_i32 : i32, i32
  }
  func.func @transform_1(%arg0: i32) -> (i32, i32) {
    %c0_i32 = arith.constant 0 : i32
    %c0_i32_0 = arith.constant 0 : i32
    %c0_i32_1 = arith.constant 0 : i32
    return %c0_i32, %c0_i32_0 : i32, i32
  }
  func.func @transform_2(%arg0: i32) -> (i32, i32) {
    %c0_i32 = arith.constant 0 : i32
    %c0_i32_0 = arith.constant 0 : i32
    %c0_i32_1 = arith.constant 0 : i32
    return %c0_i32, %c0_i32_0 : i32, i32
  }
  func.func @transform_3(%arg0: i32) -> (i32, i32) {
    %c0_i32 = arith.constant 0 : i32
    %c0_i32_0 = arith.constant 0 : i32
    %c0_i32_1 = arith.constant 0 : i32
    return %c0_i32, %c0_i32_0 : i32, i32
  }
  func.func @transform_4(%arg0: i32) -> (i32, i32) {
    %c0_i32 = arith.constant 0 : i32
    %c0_i32_0 = arith.constant 0 : i32
    %c0_i32_1 = arith.constant 0 : i32
    return %c0_i32, %c0_i32_0 : i32, i32
  }
  func.func @transform_5(%arg0: i32) -> (i32, i32) {
    %c0_i32 = arith.constant 0 : i32
    %c0_i32_0 = arith.constant 0 : i32
    %c0_i32_1 = arith.constant 0 : i32
    return %c0_i32, %c0_i32_0 : i32, i32
  }
  func.func @transform_6(%arg0: i32) -> (i32, i32) {
    %c0_i32 = arith.constant 0 : i32
    %c0_i32_0 = arith.constant 0 : i32
    %c0_i32_1 = arith.constant 0 : i32
    return %c0_i32, %c0_i32_0 : i32, i32
  }
  func.func @transform_7(%arg0: i32) -> (i32, i32) {
    %c0_i32 = arith.constant 0 : i32
    %c0_i32_0 = arith.constant 0 : i32
    return %arg0, %c0_i32 : i32, i32
  }
}

</mosaic_0001>

<llo_original>
// kernel: high_level_policy_forward.1
$region0: #{high_level_policy_forward.1}
  #allocation0 [shape = 'u32[]', space=smem, size = 0x4, offset = 0x4, fixed_abs, tag = 'smem constant byte address 0x4 - core index']
  #allocation1 [shape = 'u32[144,128]{1,0:T(1,128)}', space=vmem, size = 0x12000, scoped, tag = 'internal scratch']
  %s0 = inlined_call_operand.vmem [shape: f32[8,32], index: 0, kind: input, shape index: {}]
  %s1 = inlined_call_operand.vmem [shape: bf16[32,128], index: 1, kind: input, shape index: {}]
  %s2 = inlined_call_operand.vmem [shape: f32[1,128], index: 2, kind: input, shape index: {}]
  %s3 = inlined_call_operand.vmem [shape: bf16[128,128], index: 3, kind: input, shape index: {}]
  %s4 = inlined_call_operand.vmem [shape: f32[1,128], index: 4, kind: input, shape index: {}]
  %s5 = inlined_call_operand.vmem [shape: bf16[128,128], index: 5, kind: input, shape index: {}]
  %s6 = inlined_call_operand.vmem [shape: f32[1,128], index: 6, kind: input, shape index: {}]
  %s7 = inlined_call_operand.hbm [shape: f32[8,128], index: 7, kind: output, shape index: {}]
  %s8 = sld [smem:[#allocation0]]
  $region38: #{high_level_policy_forward.1} parent=0
    _
  %s10 = ssub.s32 1, %s8
  %s11 = scalar_select 0, %s10, %s8
  $region1: #{high_level_policy_forward.1} parent=0
    #allocation2 [shape = 'u8[4096]{0}', space=vmem, size = 0x1000, scoped, tag = 'output window, operand 0, single buffered']
    #allocation3 [shape = 's32[1]{0}', space=sflag, size = 0x4, scoped, tag = 'scoped memory for high_level_policy_forward.1']
    %12 = vsyncpa [#allocation3], 0
    // Predicated region
    $region2: #{high_level_policy_forward.1} parent=1 // pred_check
      _
    $region3: #{high_level_policy_forward.1} parent=1 // pred_check_branch
      %14 = sbr.rel (0) target = $region5
    $region4: #{high_level_policy_forward.1} parent=1 // pred_region
      _
    $region5: #{high_level_policy_forward.1} parent=1 // pred_fallthru
      _
    // Predicated region
    $region6: #{high_level_policy_forward.1} parent=1 // pred_check
      _
    $region7: #{high_level_policy_forward.1} parent=1 // pred_check_branch
      %16 = sbr.rel (0) target = $region9
    $region8: #{high_level_policy_forward.1} parent=1 // pred_region
      _
    $region9: #{high_level_policy_forward.1} parent=1 // pred_fallthru
      _
    // Predicated region
    $region10: #{high_level_policy_forward.1} parent=1 // pred_check
      _
    $region11: #{high_level_policy_forward.1} parent=1 // pred_check_branch
      %18 = sbr.rel (0) target = $region13
    $region12: #{high_level_policy_forward.1} parent=1 // pred_region
      _
    $region13: #{high_level_policy_forward.1} parent=1 // pred_fallthru
      _
    // Predicated region
    $region14: #{high_level_policy_forward.1} parent=1 // pred_check
      _
    $region15: #{high_level_policy_forward.1} parent=1 // pred_check_branch
      %20 = sbr.rel (0) target = $region17
    $region16: #{high_level_policy_forward.1} parent=1 // pred_region
      _
    $region17: #{high_level_policy_forward.1} parent=1 // pred_fallthru
      _
    // Predicated region
    $region18: #{high_level_policy_forward.1} parent=1 // pred_check
      _
    $region19: #{high_level_policy_forward.1} parent=1 // pred_check_branch
      %22 = sbr.rel (0) target = $region21
    $region20: #{high_level_policy_forward.1} parent=1 // pred_region
      _
    $region21: #{high_level_policy_forward.1} parent=1 // pred_fallthru
      _
    // Predicated region
    $region22: #{high_level_policy_forward.1} parent=1 // pred_check
      _
    $region23: #{high_level_policy_forward.1} parent=1 // pred_check_branch
      %24 = sbr.rel (0) target = $region25
    $region24: #{high_level_policy_forward.1} parent=1 // pred_region
      _
    $region25: #{high_level_policy_forward.1} parent=1 // pred_fallthru
      _
    // Predicated region
    $region26: #{high_level_policy_forward.1} parent=1 // pred_check
      _
    $region27: #{high_level_policy_forward.1} parent=1 // pred_check_branch
      %26 = sbr.rel (0) target = $region29
    $region28: #{high_level_policy_forward.1} parent=1 // pred_region
      _
    $region29: #{high_level_policy_forward.1} parent=1 // pred_fallthru
      _
    %v28 = vld [vmem:[%s0] sm:$0xff]
    %v29 = vpack.c.bf16 %v28, %v28
    %v30 = vld [vmem:[%s1] sm:$0xf]
    %v31 = vld [vmem:[%s1 + $0x4] sm:$0xf]
    %v32 = vld [vmem:[%s1 + $0x8] sm:$0xf]
    %v33 = vld [vmem:[%s1 + $0xc] sm:$0xf]
    %v34 = vld [vmem:[%s2] sm:$0x1]
    %v36 = vlaneseq
    %v37 = vshrl.u32 %v36, 7
    %v38 = vsub.s32 0, %v37
    %v39 = vrot.slane %v34, %v38
    %v45 = vunpack.c.l.b16 %v30
    %v46 = vunpack.c.l.b16 %v31
    %v47 = vunpack.c.l.b16 %v32
    %v48 = vunpack.c.l.b16 %v33
    %v49 = vpack.c.b16 %v46, %v45
    %v50 = vpack.c.b16 %v48, %v47
    %vm53 = vcmask 261120
    %v55 = vsel %vm53, %v29, 0
    %57 = vmatprep.subr.bf16.mxu0 0
    %58 = vmatpush1.bf16.msra.mxu0 0
    %59 = vmatprep.subr.bf16.mxu0 0
    %60 = vmatpush1.bf16.msra.mxu0 0
    %61 = vmatprep.subr.bf16.mxu0 0
    %62 = vmatpush1.bf16.msra.mxu0 0
    %63 = vmatprep.subr.bf16.mxu0 0
    %64 = vmatpush1.bf16.msra.mxu0 0
    %65 = vmatprep.subr.bf16.mxu0 0
    %66 = vmatpush1.bf16.msra.mxu0 0
    %67 = vmatprep.subr.bf16.mxu0 0
    %68 = vmatpush1.bf16.msra.mxu0 0
    %69 = vmatprep.subr.bf16.mxu0 0
    %70 = vmatpush1.bf16.msra.mxu0 %v50
    %71 = vmatprep.subr.bf16.mxu0 0
    %72 = vmatpush1.bf16.msra.mxu0 %v49
    %73 = vmatprep.subr.bf16.mxu0 0
    %74 = vmatpush2.bf16.msra.mxu0 0
    %75 = vmatprep.subr.bf16.mxu0 0
    %76 = vmatpush2.bf16.msra.mxu0 0
    %77 = vmatprep.subr.bf16.mxu0 0
    %78 = vmatpush2.bf16.msra.mxu0 0
    %79 = vmatprep.subr.bf16.mxu0 0
    %80 = vmatpush2.bf16.msra.mxu0 0
    %81 = vmatprep.subr.bf16.mxu0 0
    %82 = vmatpush2.bf16.msra.mxu0 0
    %83 = vmatprep.subr.bf16.mxu0 0
    %84 = vmatpush2.bf16.msra.mxu0 0
    %85 = vmatprep.subr.bf16.mxu0 0
    %86 = vmatpush2.bf16.msra.mxu0 0
    %87 = vmatprep.subr.bf16.mxu0 0
    %88 = vmatpush2.bf16.msra.mxu0 0
    %89 = vmatprep.mubr.bf16.mxu0 0
    %90 = vmatmul.mubr.bf16.gmra.mxu0 %v55
    %v91 = vpop.f32.mrf.mxu0
    %v92 = vadd.f32 %v39, %v91
    %v93 = vpop.f32.mrf.mxu0
    %v94 = vpop.f32.mrf.mxu0
    %v95 = vpop.f32.mrf.mxu0
    %96 = vdwg.mxu0
    %v97 = vmax.f32 %v92, 0.0
    %v98 = vpack.c.bf16 %v97, %v97
    %v99 = vld [vmem:[%s3] sm:$0xf]
    %v100 = vld [vmem:[%s3 + $0x4] sm:$0xf]
    %v101 = vld [vmem:[%s3 + $0x8] sm:$0xf]
    %v102 = vld [vmem:[%s3 + $0xc] sm:$0xf]
    %v103 = vld [vmem:[%s3 + $0x10] sm:$0xf]
    %v104 = vld [vmem:[%s3 + $0x14] sm:$0xf]
    %v105 = vld [vmem:[%s3 + $0x18] sm:$0xf]
    %v106 = vld [vmem:[%s3 + $0x1c] sm:$0xf]
    %v107 = vld [vmem:[%s3 + $0x20] sm:$0xf]
    %v108 = vld [vmem:[%s3 + $0x24] sm:$0xf]
    %v109 = vld [vmem:[%s3 + $0x28] sm:$0xf]
    %v110 = vld [vmem:[%s3 + $0x2c] sm:$0xf]
    %v111 = vld [vmem:[%s3 + $0x30] sm:$0xf]
    %v112 = vld [vmem:[%s3 + $0x34] sm:$0xf]
    %v113 = vld [vmem:[%s3 + $0x38] sm:$0xf]
    %v114 = vld [vmem:[%s3 + $0x3c] sm:$0xf]
    %v115 = vld [vmem:[%s4] sm:$0x1]
    %v117 = vlaneseq
    %v118 = vshrl.u32 %v117, 7
    %v119 = vsub.s32 0, %v118
    %v120 = vrot.slane %v115, %v119
    %v138 = vunpack.c.l.b16 %v99
    %v139 = vunpack.c.l.b16 %v100
    %v140 = vunpack.c.l.b16 %v101
    %v141 = vunpack.c.l.b16 %v102
    %v142 = vunpack.c.l.b16 %v103
    %v143 = vunpack.c.l.b16 %v104
    %v144 = vunpack.c.l.b16 %v105
    %v145 = vunpack.c.l.b16 %v106
    %v146 = vunpack.c.l.b16 %v107
    %v147 = vunpack.c.l.b16 %v108
    %v148 = vunpack.c.l.b16 %v109
    %v149 = vunpack.c.l.b16 %v110
    %v150 = vunpack.c.l.b16 %v111
    %v151 = vunpack.c.l.b16 %v112
    %v152 = vunpack.c.l.b16 %v113
    %v153 = vunpack.c.l.b16 %v114
    %v154 = vpack.c.b16 %v139, %v138
    %v155 = vpack.c.b16 %v141, %v140
    %v156 = vpack.c.b16 %v143, %v142
    %v157 = vpack.c.b16 %v145, %v144
    %v158 = vpack.c.b16 %v147, %v146
    %v159 = vpack.c.b16 %v149, %v148
    %v160 = vpack.c.b16 %v151, %v150
    %v161 = vpack.c.b16 %v153, %v152
    %170 = vmatprep.subr.bf16.mxu0 0
    %171 = vmatpush1.bf16.msra.mxu0 %v161
    %172 = vmatprep.subr.bf16.mxu0 0
    %173 = vmatpush1.bf16.msra.mxu0 %v160
    %174 = vmatprep.subr.bf16.mxu0 0
    %175 = vmatpush1.bf16.msra.mxu0 %v159
    %176 = vmatprep.subr.bf16.mxu0 0
    %177 = vmatpush1.bf16.msra.mxu0 %v158
    %178 = vmatprep.subr.bf16.mxu0 0
    %179 = vmatpush1.bf16.msra.mxu0 %v157
    %180 = vmatprep.subr.bf16.mxu0 0
    %181 = vmatpush1.bf16.msra.mxu0 %v156
    %182 = vmatprep.subr.bf16.mxu0 0
    %183 = vmatpush1.bf16.msra.mxu0 %v155
    %184 = vmatprep.subr.bf16.mxu0 0
    %185 = vmatpush1.bf16.msra.mxu0 %v154
    %186 = vmatprep.subr.bf16.mxu0 0
    %187 = vmatpush2.bf16.msra.mxu0 0
    %188 = vmatprep.subr.bf16.mxu0 0
    %189 = vmatpush2.bf16.msra.mxu0 0
    %190 = vmatprep.subr.bf16.mxu0 0
    %191 = vmatpush2.bf16.msra.mxu0 0
    %192 = vmatprep.subr.bf16.mxu0 0
    %193 = vmatpush2.bf16.msra.mxu0 0
    %194 = vmatprep.subr.bf16.mxu0 0
    %195 = vmatpush2.bf16.msra.mxu0 0
    %196 = vmatprep.subr.bf16.mxu0 0
    %197 = vmatpush2.bf16.msra.mxu0 0
    %198 = vmatprep.subr.bf16.mxu0 0
    %199 = vmatpush2.bf16.msra.mxu0 0
    %200 = vmatprep.subr.bf16.mxu0 0
    %201 = vmatpush2.bf16.msra.mxu0 0
    %202 = vmatprep.mubr.bf16.mxu0 0
    %203 = vmatmul.mubr.bf16.gmra.mxu0 %v98
    %v204 = vpop.f32.mrf.mxu0
    %v205 = vadd.f32 %v120, %v204
    %v206 = vpop.f32.mrf.mxu0
    %v207 = vpop.f32.mrf.mxu0
    %v208 = vpop.f32.mrf.mxu0
    %209 = vdwg.mxu0
    %v210 = vmax.f32 %v205, 0.0
    %v211 = vpack.c.bf16 %v210, %v210
    %v212 = vld [vmem:[%s5] sm:$0xf]
    %v213 = vld [vmem:[%s5 + $0x4] sm:$0xf]
    %v214 = vld [vmem:[%s5 + $0x8] sm:$0xf]
    %v215 = vld [vmem:[%s5 + $0xc] sm:$0xf]
    %v216 = vld [vmem:[%s5 + $0x10] sm:$0xf]
    %v217 = vld [vmem:[%s5 + $0x14] sm:$0xf]
    %v218 = vld [vmem:[%s5 + $0x18] sm:$0xf]
    %v219 = vld [vmem:[%s5 + $0x1c] sm:$0xf]
    %v220 = vld [vmem:[%s5 + $0x20] sm:$0xf]
    %v221 = vld [vmem:[%s5 + $0x24] sm:$0xf]
    %v222 = vld [vmem:[%s5 + $0x28] sm:$0xf]
    %v223 = vld [vmem:[%s5 + $0x2c] sm:$0xf]
    %v224 = vld [vmem:[%s5 + $0x30] sm:$0xf]
    %v225 = vld [vmem:[%s5 + $0x34] sm:$0xf]
    %v226 = vld [vmem:[%s5 + $0x38] sm:$0xf]
    %v227 = vld [vmem:[%s5 + $0x3c] sm:$0xf]
    %v228 = vld [vmem:[%s6] sm:$0x1]
    %v230 = vlaneseq
    %v231 = vshrl.u32 %v230, 7
    %v232 = vsub.s32 0, %v231
    %v233 = vrot.slane %v228, %v232
    %v251 = vunpack.c.l.b16 %v212
    %v252 = vunpack.c.l.b16 %v213
    %v253 = vunpack.c.l.b16 %v214
    %v254 = vunpack.c.l.b16 %v215
    %v255 = vunpack.c.l.b16 %v216
    %v256 = vunpack.c.l.b16 %v217
    %v257 = vunpack.c.l.b16 %v218
    %v258 = vunpack.c.l.b16 %v219
    %v259 = vunpack.c.l.b16 %v220
    %v260 = vunpack.c.l.b16 %v221
    %v261 = vunpack.c.l.b16 %v222
    %v262 = vunpack.c.l.b16 %v223
    %v263 = vunpack.c.l.b16 %v224
    %v264 = vunpack.c.l.b16 %v225
    %v265 = vunpack.c.l.b16 %v226
    %v266 = vunpack.c.l.b16 %v227
    %v267 = vpack.c.b16 %v252, %v251
    %v268 = vpack.c.b16 %v254, %v253
    %v269 = vpack.c.b16 %v256, %v255
    %v270 = vpack.c.b16 %v258, %v257
    %v271 = vpack.c.b16 %v260, %v259
    %v272 = vpack.c.b16 %v262, %v261
    %v273 = vpack.c.b16 %v264, %v263
    %v274 = vpack.c.b16 %v266, %v265
    %283 = vmatprep.subr.bf16.mxu0 0
    %284 = vmatpush1.bf16.msra.mxu0 %v274
    %285 = vmatprep.subr.bf16.mxu0 0
    %286 = vmatpush1.bf16.msra.mxu0 %v273
    %287 = vmatprep.subr.bf16.mxu0 0
    %288 = vmatpush1.bf16.msra.mxu0 %v272
    %289 = vmatprep.subr.bf16.mxu0 0
    %290 = vmatpush1.bf16.msra.mxu0 %v271
    %291 = vmatprep.subr.bf16.mxu0 0
    %292 = vmatpush1.bf16.msra.mxu0 %v270
    %293 = vmatprep.subr.bf16.mxu0 0
    %294 = vmatpush1.bf16.msra.mxu0 %v269
    %295 = vmatprep.subr.bf16.mxu0 0
    %296 = vmatpush1.bf16.msra.mxu0 %v268
    %297 = vmatprep.subr.bf16.mxu0 0
    %298 = vmatpush1.bf16.msra.mxu0 %v267
    %299 = vmatprep.subr.bf16.mxu0 0
    %300 = vmatpush2.bf16.msra.mxu0 0
    %301 = vmatprep.subr.bf16.mxu0 0
    %302 = vmatpush2.bf16.msra.mxu0 0
    %303 = vmatprep.subr.bf16.mxu0 0
    %304 = vmatpush2.bf16.msra.mxu0 0
    %305 = vmatprep.subr.bf16.mxu0 0
    %306 = vmatpush2.bf16.msra.mxu0 0
    %307 = vmatprep.subr.bf16.mxu0 0
    %308 = vmatpush2.bf16.msra.mxu0 0
    %309 = vmatprep.subr.bf16.mxu0 0
    %310 = vmatpush2.bf16.msra.mxu0 0
    %311 = vmatprep.subr.bf16.mxu0 0
    %312 = vmatpush2.bf16.msra.mxu0 0
    %313 = vmatprep.subr.bf16.mxu0 0
    %314 = vmatpush2.bf16.msra.mxu0 0
    %315 = vmatprep.mubr.bf16.mxu0 0
    %316 = vmatmul.mubr.bf16.gmra.mxu0 %v211
    %v317 = vpop.f32.mrf.mxu0
    %v318 = vadd.f32 %v233, %v317
    %v319 = vpop.f32.mrf.mxu0
    %v320 = vpop.f32.mrf.mxu0
    %v321 = vpop.f32.mrf.mxu0
    %322 = vdwg.mxu0
    %323 = vst [vmem:[#allocation2] sm:$0xff] %v318
    // Predicated region
    $region30: #{high_level_policy_forward.1} parent=1 // pred_check
      _
    $region31: #{high_level_policy_forward.1} parent=1 // pred_check_branch
      %325 = sbr.rel (0) target = $region33
    $region32: #{high_level_policy_forward.1} parent=1 // pred_region
      %s327 = ssub.s32 128, 128
      %328 = vsyncadd [#allocation3], %s327
      %s330 = sshll.u32 [#allocation2], 4
      %s331 = int_to_ptr.vmem [resolvable:$true] %s330
      %333 = dma.vmem_to_hbm [thread:$0]  %s331, 128, %s7, [#allocation3]
    $region33: #{high_level_policy_forward.1} parent=1 // pred_fallthru
      _
    // Predicated region
    $region34: #{high_level_policy_forward.1} parent=1 // pred_check
      _
    $region35: #{high_level_policy_forward.1} parent=1 // pred_check_branch
      %335 = sbr.rel (0) target = $region37
    $region36: #{high_level_policy_forward.1} parent=1 // pred_region
      %336 = dma.done [#allocation3], 128
    $region37: #{high_level_policy_forward.1} parent=1 // pred_fallthru
      _
    %337 = vsyncpa [#allocation3], 1

</llo_original>
